<compile_context>
chip_gen: v6e
topology: v6e:2x2x1
jax: 0.10.0
libtpu: 0.0.40
codegen_flags: <defaults>
</compile_context>

<pallas_src>
import jax
import jax.numpy as jnp
from jax.experimental import pallas as pl
from jax.experimental.pallas import tpu as pltpu


def _linear_kernel(x_ref, w_ref, b_ref, o_ref):
    # x_ref: [TB, F]   w_ref: [F, O] (pre-transposed)   b_ref: [1, O]
    # o_ref: [TB, O]
    acc = jnp.dot(x_ref[...], w_ref[...], preferred_element_type=jnp.float32)
    o_ref[...] = (acc + b_ref[...]).astype(o_ref.dtype)


def _round_up(n: int, m: int) -> int:
    return ((n + m - 1) // m) * m


@jax.jit
def dqn_forward(x, weight, bias):
    """Equivalent of DQN.forward: y = x @ weight.T + bias.

    x:      [B, F] float32
    weight: [O, F] float32 (PyTorch nn.Linear convention)
    bias:   [O]    float32
    """
    B, F = x.shape
    O, F2 = weight.shape
    assert F == F2, "weight feature dim must match x"

    # One-time tiny-weight transpose (<= a few KB) so the kernel contracts
    # along the weight's sublane axis with a plain dot (no per-step transpose).
    w_t = weight.T               # [F, O]
    b2 = bias.reshape(1, O)      # [1, O]

    # Batch tiling: single full-dim tile for small B (one dispatch, no
    # divisibility constraints); for large B use >=2 big tiles (multiple of 8)
    # so v7x's two TensorCores both engage and per-step overhead amortizes.
    if B <= 1024:
        TB = B
    else:
        TB = min(4096, _round_up(pl.cdiv(B, 2), 8))
    num_b_tiles = pl.cdiv(B, TB)

    out = pl.pallas_call(
        _linear_kernel,
        out_shape=jax.ShapeDtypeStruct((B, O), x.dtype),
        grid=(num_b_tiles,),
        in_specs=[
            pl.BlockSpec((TB, F), lambda i: (i, 0)),   # x: tiled over batch
            pl.BlockSpec((F, O), lambda i: (0, 0)),    # weight: VMEM-resident
            pl.BlockSpec((1, O), lambda i: (0, 0)),    # bias: VMEM-resident
        ],
        out_specs=pl.BlockSpec((TB, O), lambda i: (i, 0)),
        compiler_params=pltpu.CompilerParams(
            dimension_semantics=("parallel",),
        ),
    )(x, w_t, b2)

    return out


if __name__ == "__main__":
    # Small shapes consistent with a DQN state->Q-values head.
    B = 4            # batch of states
    INPUT_SIZE = 32  # state features
    OUTPUT_SIZE = 8  # actions

    key = jax.random.PRNGKey(0)
    kx, kw, kb = jax.random.split(key, 3)

    # Deterministic parameter init (PyTorch nn.Linear-style uniform bound).
    bound = 1.0 / jnp.sqrt(jnp.float32(INPUT_SIZE))
    weight = jax.random.uniform(kw, (OUTPUT_SIZE, INPUT_SIZE),
                                minval=-bound, maxval=bound, dtype=jnp.float32)
    bias = jax.random.uniform(kb, (OUTPUT_SIZE,),
                              minval=-bound, maxval=bound, dtype=jnp.float32)
    x = jax.random.normal(kx, (B, INPUT_SIZE), dtype=jnp.float32)

    y = dqn_forward(x, weight, bias)
    jax.block_until_ready(y)

    # Reference check against plain JAX (same math as torch nn.Linear).
    y_ref = x @ weight.T + bias
    assert y.shape == (B, OUTPUT_SIZE)
    assert jnp.allclose(y, y_ref, atol=1e-5, rtol=1e-5)

    print("KERNEL_OK")
</pallas_src>

<mosaic_0001>
module attributes {stable_mosaic.version = 11 : i64} {
  func.func @_linear_kernel(%arg0: i32, %arg1: memref<4x32xf32, #tpu.memory_space<vmem>>, %arg2: memref<32x8xf32, #tpu.memory_space<vmem>>, %arg3: memref<1x8xf32, #tpu.memory_space<vmem>>, %arg4: memref<4x8xf32, #tpu.memory_space<vmem>>) attributes {dimension_semantics = [#tpu.dimension_semantics<parallel>], iteration_bounds = array<i64: 1>, scalar_prefetch = 0 : i64, scratch_operands = 0 : i64, tpu.core_type = #tpu.core_type<tc>, window_params = [{transform_indices = @transform_0, window_bounds = array<i64: 4, 32>}, {pipeline_mode = #tpu.pipeline_mode<synchronous>, transform_indices = @transform_1, window_bounds = array<i64: 32, 8>}, {pipeline_mode = #tpu.pipeline_mode<synchronous>, transform_indices = @transform_2, window_bounds = array<i64: 1, 8>}, {transform_indices = @transform_3, window_bounds = array<i64: 4, 8>}]} {
    %c0 = arith.constant 0 : index
    %c0_0 = arith.constant 0 : index
    %0 = vector.load %arg1[%c0, %c0_0] : memref<4x32xf32, #tpu.memory_space<vmem>>, vector<4x32xf32>
    %c0_1 = arith.constant 0 : index
    %c0_2 = arith.constant 0 : index
    %1 = vector.load %arg2[%c0_1, %c0_2] : memref<32x8xf32, #tpu.memory_space<vmem>>, vector<32x8xf32>
    %cst = arith.constant dense<0.000000e+00> : vector<4x8xf32>
    %2 = tpu.matmul %0, %1, %cst {dimension_numbers = #tpu.dot_dimension_numbers<[1], [0], [0], [1], [0, 0, 1, 1], [], []>} : vector<4x32xf32>, vector<32x8xf32>, vector<4x8xf32> -> vector<4x8xf32>
    %c0_3 = arith.constant 0 : index
    %c0_4 = arith.constant 0 : index
    %3 = vector.load %arg3[%c0_3, %c0_4] : memref<1x8xf32, #tpu.memory_space<vmem>>, vector<1x8xf32>
    %4 = vector.broadcast %3 : vector<1x8xf32> to vector<4x8xf32>
    %5 = arith.addf %2, %4 : vector<4x8xf32>
    %c0_5 = arith.constant 0 : index
    %c0_6 = arith.constant 0 : index
    %6 = vector.load %arg4[%c0_5, %c0_6] : memref<4x8xf32, #tpu.memory_space<vmem>>, vector<4x8xf32>
    tpu.vector_store %arg4[%c0_5, %c0_6], %5 {strides = array<i32>} : memref<4x8xf32, #tpu.memory_space<vmem>>, vector<4x8xf32>,
    return
  }
  func.func @transform_0(%arg0: i32) -> (i32, i32) {
    %c0_i32 = arith.constant 0 : i32
    %c0_i32_0 = arith.constant 0 : i32
    return %arg0, %c0_i32 : i32, i32
  }
  func.func @transform_1(%arg0: i32) -> (i32, i32) {
    %c0_i32 = arith.constant 0 : i32
    %c0_i32_0 = arith.constant 0 : i32
    %c0_i32_1 = arith.constant 0 : i32
    return %c0_i32, %c0_i32_0 : i32, i32
  }
  func.func @transform_2(%arg0: i32) -> (i32, i32) {
    %c0_i32 = arith.constant 0 : i32
    %c0_i32_0 = arith.constant 0 : i32
    %c0_i32_1 = arith.constant 0 : i32
    return %c0_i32, %c0_i32_0 : i32, i32
  }
  func.func @transform_3(%arg0: i32) -> (i32, i32) {
    %c0_i32 = arith.constant 0 : i32
    %c0_i32_0 = arith.constant 0 : i32
    return %arg0, %c0_i32 : i32, i32
  }
}

</mosaic_0001>

<llo_original>
// kernel: dqn_forward.1
$region0: #{dqn_forward.1}
  #allocation0 [shape = 'u32[]', space=smem, size = 0x4, offset = 0x4, fixed_abs, tag = 'smem constant byte address 0x4 - core index']
  #allocation1 [shape = 'u32[144,128]{1,0:T(1,128)}', space=vmem, size = 0x12000, scoped, tag = 'internal scratch']
  %s0 = inlined_call_operand.vmem [shape: f32[4,32], index: 0, kind: input, shape index: {}]
  %s1 = inlined_call_operand.vmem [shape: f32[32,8], index: 1, kind: input, shape index: {}]
  %s2 = inlined_call_operand.vmem [shape: f32[1,8], index: 2, kind: input, shape index: {}]
  %s3 = inlined_call_operand.hbm [shape: f32[4,8], index: 3, kind: output, shape index: {}]
  %s4 = sld [smem:[#allocation0]]
  $region22: #{dqn_forward.1} parent=0
    _
  %s6 = ssub.s32 1, %s4
  %s7 = scalar_select 0, %s6, %s4
  $region1: #{dqn_forward.1} parent=0
    #allocation2 [shape = 'u8[2048]{0}', space=vmem, size = 0x800, scoped, tag = 'output window, operand 0, single buffered']
    #allocation3 [shape = 's32[1]{0}', space=sflag, size = 0x4, scoped, tag = 'scoped memory for dqn_forward.1']
    %8 = vsyncpa [#allocation3], 0
    // Predicated region
    $region2: #{dqn_forward.1} parent=1 // pred_check
      _
    $region3: #{dqn_forward.1} parent=1 // pred_check_branch
      %10 = sbr.rel (0) target = $region5
    $region4: #{dqn_forward.1} parent=1 // pred_region
      _
    $region5: #{dqn_forward.1} parent=1 // pred_fallthru
      _
    // Predicated region
    $region6: #{dqn_forward.1} parent=1 // pred_check
      _
    $region7: #{dqn_forward.1} parent=1 // pred_check_branch
      %12 = sbr.rel (0) target = $region9
    $region8: #{dqn_forward.1} parent=1 // pred_region
      _
    $region9: #{dqn_forward.1} parent=1 // pred_fallthru
      _
    // Predicated region
    $region10: #{dqn_forward.1} parent=1 // pred_check
      _
    $region11: #{dqn_forward.1} parent=1 // pred_check_branch
      %14 = sbr.rel (0) target = $region13
    $region12: #{dqn_forward.1} parent=1 // pred_region
      _
    $region13: #{dqn_forward.1} parent=1 // pred_fallthru
      _
    %v15 = vld [vmem:[%s0] sm:$0xf]
    %v16 = vld [vmem:[%s1] sm:$0xff]
    %v17 = vld [vmem:[%s1 + $0x8] sm:$0xff]
    %v18 = vld [vmem:[%s1 + $0x10] sm:$0xff]
    %v19 = vld [vmem:[%s1 + $0x18] sm:$0xff]
    %v20 = vld [vmem:[%s2] sm:$0x1]
    %v22 = vlaneseq
    %v23 = vshrl.u32 %v22, 7
    %v24 = vsub.s32 0, %v23
    %v25 = vrot.slane %v20, %v24
    %vm27 = vcmask 261120
    %v29 = vsel %vm27, %v15, 0
    %31 = vmatprep.subr.mxu0 0.0
    %32 = vmatpush1.msra.mxu0 0.0
    %33 = vmatprep.subr.mxu0 0.0
    %34 = vmatpush1.msra.mxu0 0.0
    %35 = vmatprep.subr.mxu0 0.0
    %36 = vmatpush1.msra.mxu0 0.0
    %37 = vmatprep.subr.mxu0 0.0
    %38 = vmatpush1.msra.mxu0 0.0
    %39 = vmatprep.subr.mxu0 0.0
    %40 = vmatpush1.msra.mxu0 0.0
    %41 = vmatprep.subr.mxu0 0.0
    %42 = vmatpush1.msra.mxu0 0.0
    %43 = vmatprep.subr.mxu0 0.0
    %44 = vmatpush1.msra.mxu0 0.0
    %45 = vmatprep.subr.mxu0 0.0
    %46 = vmatpush1.msra.mxu0 0.0
    %47 = vmatprep.subr.mxu0 0.0
    %48 = vmatpush1.msra.mxu0 0.0
    %49 = vmatprep.subr.mxu0 0.0
    %50 = vmatpush1.msra.mxu0 0.0
    %51 = vmatprep.subr.mxu0 0.0
    %52 = vmatpush1.msra.mxu0 0.0
    %53 = vmatprep.subr.mxu0 0.0
    %54 = vmatpush1.msra.mxu0 0.0
    %55 = vmatprep.subr.mxu0 0.0
    %56 = vmatpush1.msra.mxu0 %v19
    %57 = vmatprep.subr.mxu0 0.0
    %58 = vmatpush1.msra.mxu0 %v18
    %59 = vmatprep.subr.mxu0 0.0
    %60 = vmatpush1.msra.mxu0 %v17
    %61 = vmatprep.subr.mxu0 0.0
    %62 = vmatpush1.msra.mxu0 %v16
    %63 = vmatprep.subr.mxu0 0.0
    %64 = vmatpush2.msra.mxu0 0.0
    %65 = vmatprep.subr.mxu0 0.0
    %66 = vmatpush2.msra.mxu0 0.0
    %67 = vmatprep.subr.mxu0 0.0
    %68 = vmatpush2.msra.mxu0 0.0
    %69 = vmatprep.subr.mxu0 0.0
    %70 = vmatpush2.msra.mxu0 0.0
    %71 = vmatprep.subr.mxu0 0.0
    %72 = vmatpush2.msra.mxu0 0.0
    %73 = vmatprep.subr.mxu0 0.0
    %74 = vmatpush2.msra.mxu0 0.0
    %75 = vmatprep.subr.mxu0 0.0
    %76 = vmatpush2.msra.mxu0 0.0
    %77 = vmatprep.subr.mxu0 0.0
    %78 = vmatpush2.msra.mxu0 0.0
    %79 = vmatprep.subr.mxu0 0.0
    %80 = vmatpush2.msra.mxu0 0.0
    %81 = vmatprep.subr.mxu0 0.0
    %82 = vmatpush2.msra.mxu0 0.0
    %83 = vmatprep.subr.mxu0 0.0
    %84 = vmatpush2.msra.mxu0 0.0
    %85 = vmatprep.subr.mxu0 0.0
    %86 = vmatpush2.msra.mxu0 0.0
    %87 = vmatprep.subr.mxu0 0.0
    %88 = vmatpush2.msra.mxu0 0.0
    %89 = vmatprep.subr.mxu0 0.0
    %90 = vmatpush2.msra.mxu0 0.0
    %91 = vmatprep.subr.mxu0 0.0
    %92 = vmatpush2.msra.mxu0 0.0
    %93 = vmatprep.subr.mxu0 0.0
    %94 = vmatpush2.msra.mxu0 0.0
    %95 = vmatprep.mubr.f32.mxu0 0.0
    %96 = vmatmul.mubr.f32.gmra.mxu0 %v29
    %v97 = vpop.f32.mrf.mxu0
    %v98 = vadd.f32 %v25, %v97
    %v99 = vpop.f32.mrf.mxu0
    %100 = vdwg.mxu0
    %vm101 = vcmask 60416
    %102 = vst.msk [vmem:[#allocation2] sm:$0xf] %vm101, %v98
    // Predicated region
    $region14: #{dqn_forward.1} parent=1 // pred_check
      _
    $region15: #{dqn_forward.1} parent=1 // pred_check_branch
      %104 = sbr.rel (0) target = $region17
    $region16: #{dqn_forward.1} parent=1 // pred_region
      %s106 = ssub.s32 64, 64
      %107 = vsyncadd [#allocation3], %s106
      %s109 = sshll.u32 [#allocation2], 4
      %s110 = int_to_ptr.vmem [resolvable:$true] %s109
      %112 = dma.vmem_to_hbm [thread:$0]  %s110, 64, %s3, [#allocation3]
    $region17: #{dqn_forward.1} parent=1 // pred_fallthru
      _
    // Predicated region
    $region18: #{dqn_forward.1} parent=1 // pred_check
      _
    $region19: #{dqn_forward.1} parent=1 // pred_check_branch
      %114 = sbr.rel (0) target = $region21
    $region20: #{dqn_forward.1} parent=1 // pred_region
      %115 = dma.done [#allocation3], 64
    $region21: #{dqn_forward.1} parent=1 // pred_fallthru
      _
    %116 = vsyncpa [#allocation3], 1

</llo_original>
